<compile_context>
chip_gen: v5e
topology: v5e:2x2
jax: 0.10.0
libtpu: 0.0.40
codegen_flags: <defaults>
</compile_context>

<pallas_src>
import functools

import jax
import jax.numpy as jnp
from jax.experimental import pallas as pl
from jax.experimental.pallas import tpu as pltpu

LANES = 128
MAX_BLOCK_ROWS = 1024      # 0.5 MiB per f32 input tile
ROW_ALIGN = 8              # sublane alignment for the slab
NUM_SPLITS_MAX = 2         # leading "parallel" axis (v7x has 2 TensorCores)


def _nll_partial_kernel(p_ref, lv_ref, g_ref, out_ref, *,
                        n_elems, block_rows, steps_per_split, total_blocks):
    s = pl.program_id(0)   # core split
    j = pl.program_id(1)   # step within split (reduction axis, "arbitrary")

    @pl.when(j == 0)
    def _():
        out_ref[...] = jnp.zeros_like(out_ref)

    p = p_ref[...].astype(jnp.float32)
    lv = lv_ref[...].astype(jnp.float32)
    g = g_ref[...].astype(jnp.float32)

    diff = p - g
    loss = 0.5 * (jnp.exp(-lv) * (diff * diff) + lv)

    # Mask (a) the ragged element tail and (b) clamped duplicate blocks that
    # appear when total_blocks is not divisible by the number of splits.
    step = s * steps_per_split + j
    row_ids = step * block_rows + jax.lax.broadcasted_iota(
        jnp.int32, (block_rows, LANES), 0)
    lane_ids = jax.lax.broadcasted_iota(jnp.int32, (block_rows, LANES), 1)
    flat_ids = row_ids * LANES + lane_ids
    valid = jnp.logical_and(step < total_blocks, flat_ids < n_elems)
    loss = jnp.where(valid, loss, 0.0)

    # Reduce the (block_rows, 128) tile to one vreg-shaped (8, 128) partial.
    # This is pure VPU (vreg-wise adds); the cross-lane reduce happens once,
    # outside the kernel, on (num_splits, 8, 128) partials.
    out_ref[0] += loss.reshape(block_rows // 8, 8, LANES).sum(axis=0)


def nll_loss(pred_depth, pred_logvar, gt_depth, *, max_block_rows=MAX_BLOCK_ROWS):
    """Gaussian NLL loss, mean-reduced over all elements. Returns f32 scalar."""
    assert pred_depth.shape == pred_logvar.shape == gt_depth.shape
    assert max_block_rows % ROW_ALIGN == 0
    n_elems = pred_depth.size

    pad_to = ROW_ALIGN * LANES
    padded = ((n_elems + pad_to - 1) // pad_to) * pad_to

    def to_slab(x):
        x = jnp.ravel(x)                       # free reshape, native dtype
        if padded != n_elems:                  # static check; small pad only
            x = jnp.pad(x, (0, padded - n_elems))
        return x.reshape(-1, LANES)

    p2 = to_slab(pred_depth)
    lv2 = to_slab(pred_logvar)
    g2 = to_slab(gt_depth)

    rows = padded // LANES                     # multiple of 8
    block_rows = min(max_block_rows, rows)
    total_blocks = -(-rows // block_rows)
    num_splits = min(NUM_SPLITS_MAX, total_blocks)
    steps_per_split = -(-total_blocks // num_splits)

    def in_map(s, j):
        # Clamp so the block index stays in range; clamped duplicates are
        # zeroed in-kernel via the `step < total_blocks` mask.
        return (jnp.minimum(s * steps_per_split + j, total_blocks - 1), 0)

    in_spec = pl.BlockSpec((block_rows, LANES), in_map)

    kernel = functools.partial(
        _nll_partial_kernel,
        n_elems=n_elems,
        block_rows=block_rows,
        steps_per_split=steps_per_split,
        total_blocks=total_blocks,
    )

    partials = pl.pallas_call(
        kernel,
        out_shape=jax.ShapeDtypeStruct((num_splits, ROW_ALIGN, LANES), jnp.float32),
        grid_spec=pltpu.PrefetchScalarGridSpec(
            num_scalar_prefetch=0,
            grid=(num_splits, steps_per_split),
            in_specs=[in_spec, in_spec, in_spec],
            out_specs=pl.BlockSpec((1, ROW_ALIGN, LANES), lambda s, j: (s, 0, 0)),
        ),
        compiler_params=pltpu.CompilerParams(
            dimension_semantics=("parallel", "arbitrary"),
        ),
    )(p2, lv2, g2)

    total = jnp.sum(partials)
    return (total / jnp.float32(n_elems)).astype(jnp.float32)


def _reference(pred_depth, pred_logvar, gt_depth):
    loss = (0.5 * jnp.exp(-pred_logvar) * (pred_depth - gt_depth) ** 2
            + 0.5 * pred_logvar)
    return jnp.mean(loss.astype(jnp.float32))


if __name__ == "__main__":
    key = jax.random.PRNGKey(0)

    # Test 1: small aligned shape consistent with the module: (B, 1, H, W).
    B, C, H, W = 2, 1, 16, 16
    k1, k2, k3, k4, k5, k6 = jax.random.split(key, 6)
    pred_depth = jax.random.uniform(k1, (B, C, H, W), jnp.float32, 0.5, 5.0)
    pred_logvar = jax.random.normal(k2, (B, C, H, W), jnp.float32) * 0.5
    gt_depth = jax.random.uniform(k3, (B, C, H, W), jnp.float32, 0.5, 5.0)

    out = jax.block_until_ready(nll_loss(pred_depth, pred_logvar, gt_depth))
    ref = _reference(pred_depth, pred_logvar, gt_depth)
    assert jnp.allclose(out, ref, rtol=1e-5, atol=1e-5), (out, ref)

    # Test 2: ragged shape + tiny block size to exercise multi-block,
    # 2-way split clamping, and the in-kernel tail mask.
    shape2 = (1, 1, 50, 50)
    pd2 = jax.random.uniform(k4, shape2, jnp.float32, 0.5, 5.0)
    lv2 = jax.random.normal(k5, shape2, jnp.float32) * 0.5
    gt2 = jax.random.uniform(k6, shape2, jnp.float32, 0.5, 5.0)

    out2 = jax.block_until_ready(nll_loss(pd2, lv2, gt2, max_block_rows=8))
    ref2 = _reference(pd2, lv2, gt2)
    assert jnp.allclose(out2, ref2, rtol=1e-5, atol=1e-5), (out2, ref2)

    print("KERNEL_OK")
</pallas_src>

<mosaic_0001>
module attributes {stable_mosaic.version = 11 : i64} {
  func.func @_nll_partial_kernel(%arg0: i32, %arg1: i32, %arg2: memref<8x128xf32, #tpu.memory_space<vmem>>, %arg3: memref<8x128xf32, #tpu.memory_space<vmem>>, %arg4: memref<8x128xf32, #tpu.memory_space<vmem>>, %arg5: memref<1x8x128xf32, #tpu.memory_space<vmem>>) attributes {dimension_semantics = [#tpu.dimension_semantics<parallel>, #tpu.dimension_semantics<arbitrary>], iteration_bounds = array<i64: 1, 1>, scalar_prefetch = 0 : i64, scratch_operands = 0 : i64, tpu.core_type = #tpu.core_type<tc>, window_params = [{transform_indices = @transform_0, window_bounds = array<i64: 8, 128>}, {transform_indices = @transform_1, window_bounds = array<i64: 8, 128>}, {transform_indices = @transform_2, window_bounds = array<i64: 8, 128>}, {transform_indices = @transform_3, window_bounds = array<i64: 1, 8, 128>}]} {
    %c0_i32 = arith.constant 0 : i32
    %0 = arith.cmpi eq, %arg1, %c0_i32 : i32
    %1 = arith.extui %0 : i1 to i32
    %c0_i32_0 = arith.constant 0 : i32
    %2 = arith.cmpi ne, %1, %c0_i32_0 : i32
    scf.if %2 {
      %cst_16 = arith.constant 0.000000e+00 : f32
      %40 = vector.broadcast %cst_16 : f32 to vector<1x8x128xf32>
      %c0_17 = arith.constant 0 : index
      %c0_18 = arith.constant 0 : index
      %c0_19 = arith.constant 0 : index
      %41 = vector.load %arg5[%c0_17, %c0_18, %c0_19] : memref<1x8x128xf32, #tpu.memory_space<vmem>>, vector<1x8x128xf32>
      tpu.vector_store %arg5[%c0_17, %c0_18, %c0_19], %40 {strides = array<i32>} : memref<1x8x128xf32, #tpu.memory_space<vmem>>, vector<1x8x128xf32>,
    } else {
    }
    %c0 = arith.constant 0 : index
    %c0_1 = arith.constant 0 : index
    %3 = vector.load %arg2[%c0, %c0_1] : memref<8x128xf32, #tpu.memory_space<vmem>>, vector<8x128xf32>
    %c0_2 = arith.constant 0 : index
    %c0_3 = arith.constant 0 : index
    %4 = vector.load %arg3[%c0_2, %c0_3] : memref<8x128xf32, #tpu.memory_space<vmem>>, vector<8x128xf32>
    %c0_4 = arith.constant 0 : index
    %c0_5 = arith.constant 0 : index
    %5 = vector.load %arg4[%c0_4, %c0_5] : memref<8x128xf32, #tpu.memory_space<vmem>>, vector<8x128xf32>
    %6 = arith.subf %3, %5 : vector<8x128xf32>
    %cst = arith.constant 0.000000e+00 : f32
    %7 = vector.broadcast %cst : f32 to vector<8x128xf32>
    %8 = arith.subf %7, %4 : vector<8x128xf32>
    %9 = math.exp %8 : vector<8x128xf32>
    %10 = arith.mulf %6, %6 : vector<8x128xf32>
    %11 = arith.mulf %9, %10 : vector<8x128xf32>
    %12 = arith.addf %11, %4 : vector<8x128xf32>
    %cst_6 = arith.constant 5.000000e-01 : f32
    %13 = vector.broadcast %cst_6 : f32 to vector<8x128xf32>
    %14 = arith.mulf %13, %12 : vector<8x128xf32>
    %c1_i32 = arith.constant 1 : i32
    %15 = arith.muli %arg0, %c1_i32 : i32
    %16 = arith.addi %15, %arg1 : i32
    %c8_i32 = arith.constant 8 : i32
    %17 = arith.muli %16, %c8_i32 : i32
    %18 = tpu.iota {dimensions = array<i32: 0>} : vector<8x128xi32>
    %19 = vector.broadcast %17 : i32 to vector<8x128xi32>
    %20 = arith.addi %19, %18 : vector<8x128xi32>
    %21 = tpu.iota {dimensions = array<i32: 1>} : vector<8x128xi32>
    %c128_i32 = arith.constant 128 : i32
    %22 = vector.broadcast %c128_i32 : i32 to vector<8x128xi32>
    %23 = arith.muli %20, %22 : vector<8x128xi32>
    %24 = arith.addi %23, %21 : vector<8x128xi32>
    %c1_i32_7 = arith.constant 1 : i32
    %25 = arith.cmpi slt, %16, %c1_i32_7 : i32
    %c512_i32 = arith.constant 512 : i32
    %26 = vector.broadcast %c512_i32 : i32 to vector<8x128xi32>
    %27 = arith.cmpi slt, %24, %26 : vector<8x128xi32>
    %28 = vector.broadcast %25 : i1 to vector<8x128xi1>
    %29 = arith.andi %28, %27 : vector<8x128xi1>
    %cst_8 = arith.constant 0.000000e+00 : f32
    %30 = vector.broadcast %cst_8 : f32 to vector<8x128xf32>
    %31 = arith.select %29, %14, %30 : vector<8x128xi1>, vector<8x128xf32>
    %c0_9 = arith.constant 0 : index
    %c0_10 = arith.constant 0 : index
    %c0_11 = arith.constant 0 : index
    %32 = vector.load %arg5[%c0_9, %c0_10, %c0_11] : memref<1x8x128xf32, #tpu.memory_space<vmem>>, vector<1x8x128xf32>
    %33 = vector.shape_cast %32 : vector<1x8x128xf32> to vector<8x128xf32>
    %34 = vector.shape_cast %31 : vector<8x128xf32> to vector<1x8x128xf32>
    %cst_12 = arith.constant dense<0.000000e+00> : vector<8x128xf32>
    %35 = vector.multi_reduction <add>, %34, %cst_12 [0] : vector<1x8x128xf32> to vector<8x128xf32>
    %36 = arith.addf %33, %35 : vector<8x128xf32>
    %c0_13 = arith.constant 0 : index
    %c0_14 = arith.constant 0 : index
    %c0_15 = arith.constant 0 : index
    %37 = vector.load %arg5[%c0_13, %c0_14, %c0_15] : memref<1x8x128xf32, #tpu.memory_space<vmem>>, vector<1x8x128xf32>
    %38 = vector.shape_cast %37 : vector<1x8x128xf32> to vector<8x128xf32>
    %39 = vector.shape_cast %36 : vector<8x128xf32> to vector<1x8x128xf32>
    tpu.vector_store %arg5[%c0_13, %c0_14, %c0_15], %39 {strides = array<i32>} : memref<1x8x128xf32, #tpu.memory_space<vmem>>, vector<1x8x128xf32>,
    return
  }
  func.func @transform_0(%arg0: i32, %arg1: i32) -> (i32, i32) {
    %c1_i32 = arith.constant 1 : i32
    %0 = arith.muli %arg0, %c1_i32 : i32
    %1 = arith.addi %0, %arg1 : i32
    %c0_i32 = arith.constant 0 : i32
    %2 = arith.minsi %1, %c0_i32 : i32
    %c0_i32_0 = arith.constant 0 : i32
    %c0_i32_1 = arith.constant 0 : i32
    return %2, %c0_i32_0 : i32, i32
  }
  func.func @transform_1(%arg0: i32, %arg1: i32) -> (i32, i32) {
    %c1_i32 = arith.constant 1 : i32
    %0 = arith.muli %arg0, %c1_i32 : i32
    %1 = arith.addi %0, %arg1 : i32
    %c0_i32 = arith.constant 0 : i32
    %2 = arith.minsi %1, %c0_i32 : i32
    %c0_i32_0 = arith.constant 0 : i32
    %c0_i32_1 = arith.constant 0 : i32
    return %2, %c0_i32_0 : i32, i32
  }
  func.func @transform_2(%arg0: i32, %arg1: i32) -> (i32, i32) {
    %c1_i32 = arith.constant 1 : i32
    %0 = arith.muli %arg0, %c1_i32 : i32
    %1 = arith.addi %0, %arg1 : i32
    %c0_i32 = arith.constant 0 : i32
    %2 = arith.minsi %1, %c0_i32 : i32
    %c0_i32_0 = arith.constant 0 : i32
    %c0_i32_1 = arith.constant 0 : i32
    return %2, %c0_i32_0 : i32, i32
  }
  func.func @transform_3(%arg0: i32, %arg1: i32) -> (i32, i32, i32) {
    %c0_i32 = arith.constant 0 : i32
    %c0_i32_0 = arith.constant 0 : i32
    %c0_i32_1 = arith.constant 0 : i32
    return %arg0, %c0_i32, %c0_i32_0 : i32, i32, i32
  }
}

</mosaic_0001>

<llo_original>
// kernel: tpu_custom_call.1
$region0: #{tpu_custom_call.1}
  #allocation0 [shape = 'u32[]', space=smem, size = 0x4, offset = 0x4, fixed_abs, tag = 'smem constant byte address 0x4 - core index']
  #allocation1 [shape = 'u32[72,128]{1,0:T(1,128)}', space=vmem, size = 0x9000, scoped, tag = 'internal scratch']
  %s0 = inlined_call_operand.hbm [shape: f32[8,128], index: 0, kind: input, shape index: {}]
  %s1 = inlined_call_operand.hbm [shape: f32[8,128], index: 1, kind: input, shape index: {}]
  %s2 = inlined_call_operand.hbm [shape: f32[8,128], index: 2, kind: input, shape index: {}]
  %s3 = inlined_call_operand.hbm [shape: f32[1,8,128], index: 3, kind: output, shape index: {}]
  %s4 = sld [smem:[#allocation0]]
  $region38: #{tpu_custom_call.1} parent=0
    _
  %s6 = ssub.s32 1, %s4
  %s7 = scalar_select 0, %s6, %s4
  $region1: #{tpu_custom_call.1} parent=0
    #allocation2 [shape = 'u8[4096]{0}', space=vmem, size = 0x1000, scoped, tag = 'input window, operand 0, single buffered']
    #allocation3 [shape = 's32[1]{0}', space=sflag, size = 0x4, scoped, tag = 'scoped memory for tpu_custom_call.1']
    #allocation4 [shape = 's32[1]{0}', space=sflag, size = 0x4, scoped, tag = 'scoped memory for tpu_custom_call.1']
    #allocation5 [shape = 'u8[4096]{0}', space=vmem, size = 0x1000, scoped, tag = 'input window, operand 1, single buffered']
    #allocation6 [shape = 's32[1]{0}', space=sflag, size = 0x4, scoped, tag = 'scoped memory for tpu_custom_call.1']
    #allocation7 [shape = 'u8[4096]{0}', space=vmem, size = 0x1000, scoped, tag = 'input window, operand 2, single buffered']
    #allocation8 [shape = 'u8[4096]{0}', space=vmem, size = 0x1000, scoped, tag = 'output window, operand 0, single buffered']
    %8 = vsyncpa [#allocation3], 0
    %9 = vsyncpa [#allocation6], 0
    %10 = vsyncpa [#allocation4], 0
    // Predicated region
    $region2: #{tpu_custom_call.1} parent=1 // pred_check
      _
    $region3: #{tpu_custom_call.1} parent=1 // pred_check_branch
      %12 = sbr.rel (0) target = $region5
    $region4: #{tpu_custom_call.1} parent=1 // pred_region
      %s13 = sadd.s32 0, 0
      %p14 = scmp.lt.s32.totalorder %s13, 0
      %s15 = scalar_select %p14, %s13, 0
      %17 = vsyncadd [#allocation3], 0
      %s18 = smul.addr %s15, 8
      %s19 = scalar_lea.hbm %s0, %s18
      %s21 = sshll.u32 %s19, 4
      %s22 = int_to_ptr.hbm [resolvable:$true] %s21
      %s23 = sshll.u32 [#allocation2], 4
      %s24 = int_to_ptr.vmem [resolvable:$true] %s23
      %26 = dma.hbm_to_vmem [thread:$0]  %s22, 128, %s24, [#allocation3]
    $region5: #{tpu_custom_call.1} parent=1 // pred_fallthru
      _
    // Predicated region
    $region6: #{tpu_custom_call.1} parent=1 // pred_check
      _
    $region7: #{tpu_custom_call.1} parent=1 // pred_check_branch
      %28 = sbr.rel (0) target = $region9
    $region8: #{tpu_custom_call.1} parent=1 // pred_region
      %s29 = sadd.s32 0, 0
      %p30 = scmp.lt.s32.totalorder %s29, 0
      %s31 = scalar_select %p30, %s29, 0
      %33 = vsyncadd [#allocation6], 0
      %s34 = smul.addr %s31, 8
      %s35 = scalar_lea.hbm %s1, %s34
      %s37 = sshll.u32 %s35, 4
      %s38 = int_to_ptr.hbm [resolvable:$true] %s37
      %s39 = sshll.u32 [#allocation5], 4
      %s40 = int_to_ptr.vmem [resolvable:$true] %s39
      %42 = dma.hbm_to_vmem [thread:$0]  %s38, 128, %s40, [#allocation6]
    $region9: #{tpu_custom_call.1} parent=1 // pred_fallthru
      _
    // Predicated region
    $region10: #{tpu_custom_call.1} parent=1 // pred_check
      _
    $region11: #{tpu_custom_call.1} parent=1 // pred_check_branch
      %44 = sbr.rel (0) target = $region13
    $region12: #{tpu_custom_call.1} parent=1 // pred_region
      %s45 = sadd.s32 0, 0
      %p46 = scmp.lt.s32.totalorder %s45, 0
      %s47 = scalar_select %p46, %s45, 0
      %49 = vsyncadd [#allocation6], 0
      %s50 = smul.addr %s47, 8
      %s51 = scalar_lea.hbm %s2, %s50
      %s53 = sshll.u32 %s51, 4
      %s54 = int_to_ptr.hbm [resolvable:$true] %s53
      %s55 = sshll.u32 [#allocation7], 4
      %s56 = int_to_ptr.vmem [resolvable:$true] %s55
      %58 = dma.hbm_to_vmem [thread:$0]  %s54, 128, %s56, [#allocation6]
    $region13: #{tpu_custom_call.1} parent=1 // pred_fallthru
      _
    // Predicated region
    $region14: #{tpu_custom_call.1} parent=1 // pred_check
      _
    $region15: #{tpu_custom_call.1} parent=1 // pred_check_branch
      %60 = sbr.rel (0) target = $region17
    $region16: #{tpu_custom_call.1} parent=1 // pred_region
      %62 = dma.done [#allocation3], 128
    $region17: #{tpu_custom_call.1} parent=1 // pred_fallthru
      _
    // Predicated region
    $region18: #{tpu_custom_call.1} parent=1 // pred_check
      _
    $region19: #{tpu_custom_call.1} parent=1 // pred_check_branch
      %64 = sbr.rel (0) target = $region21
    $region20: #{tpu_custom_call.1} parent=1 // pred_region
      %66 = dma.done [#allocation6], 128
    $region21: #{tpu_custom_call.1} parent=1 // pred_fallthru
      _
    // Predicated region
    $region22: #{tpu_custom_call.1} parent=1 // pred_check
      _
    $region23: #{tpu_custom_call.1} parent=1 // pred_check_branch
      %68 = sbr.rel (0) target = $region25
    $region24: #{tpu_custom_call.1} parent=1 // pred_region
      %70 = dma.done [#allocation6], 128
    $region25: #{tpu_custom_call.1} parent=1 // pred_fallthru
      _
    %s71 = sadd.s32 0, 0
    %p72 = scmp.lt.s32.totalorder %s71, 0
    %s73 = scalar_select %p72, %s71, 0
    %s74 = sadd.s32 0, 0
    %p75 = scmp.lt.s32.totalorder %s74, 0
    %s76 = scalar_select %p75, %s74, 0
    %s77 = sadd.s32 0, 0
    %p78 = scmp.lt.s32.totalorder %s77, 0
    %s79 = scalar_select %p78, %s77, 0
    %p80 = scmp.eq.s32.totalorder 0, 0
    // Predicated region
    $region26: #{tpu_custom_call.1} parent=1 // pred_check
      %p81 = pneg %p80
    $region27: #{tpu_custom_call.1} parent=1 // pred_check_branch
      %83 = sbr.rel (%p81) target = $region29
    $region28: #{tpu_custom_call.1} parent=1 // pred_region
      %84 = vst [vmem:[#allocation8] sm:$0xff] 0.0
    $region29: #{tpu_custom_call.1} parent=1 // pred_fallthru
      _
    %v85 = vld [vmem:[#allocation2] sm:$0xff]
    %v86 = vld [vmem:[#allocation5] sm:$0xff]
    %v87 = vld [vmem:[#allocation7] sm:$0xff]
    %v88 = vsub.f32 %v85, %v87
    %v89 = vsub.f32 0.0, %v86
    %v90 = vmul.f32 %v89, 1.442695
    %v91 = vpow.pop %v90
    %v92 = vmul.f32 %v88, %v88
    %v93 = vmul.f32 %v91, %v92
    %v94 = vadd.f32 %v93, %v86
    %v95 = vmul.f32 %v94, 0.5
    %s96 = sadd.s32 0, 0
    %s97 = smul.u32 %s96, 8
    %v98 = vlaneseq
    %v99 = vshrl.u32 %v98, 7
    %v100 = vstv %s97
    %v101 = vadd.s32 %v100, %v99
    %v102 = vlaneseq
    %v103 = vand.u32 %v102, 127
    %v104 = vmul.u32 %v101, 128
    %v105 = vadd.s32 %v104, %v103
    %p106 = scmp.lt.s32.totalorder %s96, 1
    %vm107 = vcmp.lt.s32.totalorder %v105, 512
    %s108 = scalar_select %p106, 1, 0
    %v109 = vstv %s108
    %vm110 = vcmp.eq.s32.totalorder %v109, 1
    %vm111 = vmand %vm110, %vm107
    %v112 = vsel %vm111, %v95, 0.0
    %v113 = vld [vmem:[#allocation8] sm:$0xff]
    %v114 = vadd.f32 %v112, 0.0
    %v115 = vadd.f32 %v113, %v114
    %116 = vst [vmem:[#allocation8] sm:$0xff] %v115
    // Predicated region
    $region30: #{tpu_custom_call.1} parent=1 // pred_check
      _
    $region31: #{tpu_custom_call.1} parent=1 // pred_check_branch
      %118 = sbr.rel (0) target = $region33
    $region32: #{tpu_custom_call.1} parent=1 // pred_region
      %120 = vsyncadd [#allocation4], 0
      %s122 = sshll.u32 [#allocation8], 4
      %s123 = int_to_ptr.vmem [resolvable:$true] %s122
      %s124 = sshll.u32 %s3, 4
      %s125 = int_to_ptr.hbm [resolvable:$true] %s124
      %127 = dma.vmem_to_hbm [thread:$0]  %s123, 128, %s125, [#allocation4]
    $region33: #{tpu_custom_call.1} parent=1 // pred_fallthru
      _
    // Predicated region
    $region34: #{tpu_custom_call.1} parent=1 // pred_check
      _
    $region35: #{tpu_custom_call.1} parent=1 // pred_check_branch
      %129 = sbr.rel (0) target = $region37
    $region36: #{tpu_custom_call.1} parent=1 // pred_region
      %131 = dma.done [#allocation4], 128
    $region37: #{tpu_custom_call.1} parent=1 // pred_fallthru
      _
    %132 = vsyncpa [#allocation3], 1
    %133 = vsyncpa [#allocation6], 1
    %134 = vsyncpa [#allocation4], 1

</llo_original>
